<compile_context>
chip_gen: v6e
topology: v6e:2x2x1
jax: 0.10.0
libtpu: 0.0.40
codegen_flags: <defaults>
</compile_context>

<pallas_src>
import jax
import jax.numpy as jnp
from jax.experimental import pallas as pl
from jax.experimental.pallas import tpu as pltpu


_LANE = 128
_TARGET_BLOCK_BYTES = 4 << 20   # ~4 MiB per tile -> ~16 MiB double-buffered in+out
_VMEM_LIMIT_BYTES = 32 << 20    # explicit limit so 4 MiB tiles also fit on v5e


def _identity_kernel(x_ref, o_ref):
    # No-op forward: copy the input tile to the output tile unchanged.
    o_ref[...] = x_ref[...]


def _packed_sublane(dtype) -> int:
    # 8 sublane rows per vreg at 32-bit; sub-32-bit dtypes pack more rows.
    itemsize = jnp.dtype(dtype).itemsize
    return max(8, 32 // max(1, itemsize))


def basic_module_forward(x: jax.Array, *, force_kernel: bool = False) -> jax.Array:
    """Pallas equivalent of BasicModule.forward().

    The PyTorch forward does nothing, so by default this is a pure
    pass-through with zero added work for every input size.  With
    force_kernel=True the data is routed through a tiled, lane-dense identity
    Pallas kernel purely to exercise/validate the kernel path.
    """
    if not force_kernel:
        # Semantic no-op: no kernel, no HBM traffic, no launch overhead.
        return x

    n = x.size
    itemsize = jnp.dtype(x.dtype).itemsize
    pack = _packed_sublane(x.dtype)

    # Pick the widest lane-dense column width (multiple of 128, up to 8192)
    # such that the flat length factors exactly into
    # (rows multiple of the packed-sublane height, cols): no padding, ever.
    cols = None
    c = 8192
    while c >= _LANE:
        if n % (c * pack) == 0:
            cols = c
            break
        c //= 2
    if cols is None:
        # No clean factorization: the forward is a no-op anyway, so skip the
        # kernel rather than pad (padding would ~triple HBM traffic).
        return x

    rows = n // cols
    slab = x.reshape(rows, cols)

    # Row tile sized to ~_TARGET_BLOCK_BYTES; rounded to the packed-sublane
    # multiple so the copy stays on the unmasked vst path.
    tm = max(pack, (_TARGET_BLOCK_BYTES // (cols * itemsize)) // pack * pack)
    tm = min(tm, rows)
    grid_m = pl.cdiv(rows, tm)

    out = pl.pallas_call(
        _identity_kernel,
        out_shape=jax.ShapeDtypeStruct((rows, cols), x.dtype),
        grid_spec=pltpu.PrefetchScalarGridSpec(
            num_scalar_prefetch=0,
            grid=(grid_m,),
            in_specs=[pl.BlockSpec((tm, cols), lambda i: (i, 0))],
            out_specs=pl.BlockSpec((tm, cols), lambda i: (i, 0)),
        ),
        compiler_params=pltpu.CompilerParams(
            dimension_semantics=("parallel",),
            vmem_limit_bytes=_VMEM_LIMIT_BYTES,
        ),
        # No input_output_aliases: x remains live in the caller, so donating
        # it would only make XLA insert a defensive copy (hidden extra nbytes).
    )(slab)

    return out.reshape(x.shape)


if __name__ == "__main__":
    key = jax.random.PRNGKey(0)
    # Small NCHW example input (batch=2, channels=4, spatial=16x16).
    x = jax.random.normal(key, (2, 4, 16, 16), dtype=jnp.float32)

    # Default path: pure pass-through (forward is semantically empty).
    y_fast = basic_module_forward(x)
    jax.block_until_ready(y_fast)
    assert y_fast.shape == x.shape and y_fast.dtype == x.dtype
    assert bool(jnp.allclose(y_fast, x))

    # Kernel path: exercise the tiled, lane-dense identity Pallas kernel.
    y = basic_module_forward(x, force_kernel=True)
    jax.block_until_ready(y)
    assert y.shape == x.shape and y.dtype == x.dtype
    assert bool(jnp.allclose(y, x))

    print("KERNEL_OK")
</pallas_src>

<mosaic_0001>
module attributes {stable_mosaic.version = 11 : i64} {
  func.func @_identity_kernel(%arg0: i32, %arg1: memref<8x256xf32, #tpu.memory_space<vmem>>, %arg2: memref<8x256xf32, #tpu.memory_space<vmem>>) attributes {dimension_semantics = [#tpu.dimension_semantics<parallel>], iteration_bounds = array<i64: 1>, scalar_prefetch = 0 : i64, scratch_operands = 0 : i64, tpu.core_type = #tpu.core_type<tc>, window_params = [{transform_indices = @transform_0, window_bounds = array<i64: 8, 256>}, {transform_indices = @transform_1, window_bounds = array<i64: 8, 256>}]} {
    %c0 = arith.constant 0 : index
    %c0_0 = arith.constant 0 : index
    %0 = vector.load %arg1[%c0, %c0_0] : memref<8x256xf32, #tpu.memory_space<vmem>>, vector<8x256xf32>
    %c0_1 = arith.constant 0 : index
    %c0_2 = arith.constant 0 : index
    %1 = vector.load %arg2[%c0_1, %c0_2] : memref<8x256xf32, #tpu.memory_space<vmem>>, vector<8x256xf32>
    tpu.vector_store %arg2[%c0_1, %c0_2], %0 {strides = array<i32>} : memref<8x256xf32, #tpu.memory_space<vmem>>, vector<8x256xf32>,
    return
  }
  func.func @transform_0(%arg0: i32) -> (i32, i32) {
    %c0_i32 = arith.constant 0 : i32
    %c0_i32_0 = arith.constant 0 : i32
    return %arg0, %c0_i32 : i32, i32
  }
  func.func @transform_1(%arg0: i32) -> (i32, i32) {
    %c0_i32 = arith.constant 0 : i32
    %c0_i32_0 = arith.constant 0 : i32
    return %arg0, %c0_i32 : i32, i32
  }
}

</mosaic_0001>

<llo_original>
// kernel: tpu_custom_call.1
$region0: #{tpu_custom_call.1}
  #allocation0 [shape = 'u32[]', space=smem, size = 0x4, offset = 0x4, fixed_abs, tag = 'smem constant byte address 0x4 - core index']
  #allocation1 [shape = 'u32[144,128]{1,0:T(1,128)}', space=vmem, size = 0x12000, scoped, tag = 'internal scratch']
  %s0 = inlined_call_operand.hbm [shape: f32[8,256], index: 0, kind: input, shape index: {}]
  %s1 = inlined_call_operand.hbm [shape: f32[8,256], index: 1, kind: output, shape index: {}]
  %s2 = sld [smem:[#allocation0]]
  $region18: #{tpu_custom_call.1} parent=0
    _
  %s4 = ssub.s32 1, %s2
  %s5 = scalar_select 0, %s4, %s2
  $region1: #{tpu_custom_call.1} parent=0
    #allocation2 [shape = 'u8[8192]{0}', space=vmem, size = 0x2000, scoped, tag = 'input window, operand 0, single buffered']
    #allocation3 [shape = 's32[1]{0}', space=sflag, size = 0x4, scoped, tag = 'scoped memory for tpu_custom_call.1']
    #allocation4 [shape = 's32[1]{0}', space=sflag, size = 0x4, scoped, tag = 'scoped memory for tpu_custom_call.1']
    #allocation5 [shape = 'u8[8192]{0}', space=vmem, size = 0x2000, scoped, tag = 'output window, operand 0, single buffered']
    %6 = vsyncpa [#allocation3], 0
    %7 = vsyncpa [#allocation4], 0
    // Predicated region
    $region2: #{tpu_custom_call.1} parent=1 // pred_check
      _
    $region3: #{tpu_custom_call.1} parent=1 // pred_check_branch
      %9 = sbr.rel (0) target = $region5
    $region4: #{tpu_custom_call.1} parent=1 // pred_region
      %s11 = ssub.s32 256, 256
      %12 = vsyncadd [#allocation3], %s11
      %s14 = sshll.u32 [#allocation2], 4
      %s15 = int_to_ptr.vmem [resolvable:$true] %s14
      %17 = dma.hbm_to_vmem [thread:$0]  %s0, 256, %s15, [#allocation3]
    $region5: #{tpu_custom_call.1} parent=1 // pred_fallthru
      _
    // Predicated region
    $region6: #{tpu_custom_call.1} parent=1 // pred_check
      _
    $region7: #{tpu_custom_call.1} parent=1 // pred_check_branch
      %19 = sbr.rel (0) target = $region9
    $region8: #{tpu_custom_call.1} parent=1 // pred_region
      %20 = dma.done [#allocation3], 256
    $region9: #{tpu_custom_call.1} parent=1 // pred_fallthru
      _
    %v21 = vld [vmem:[#allocation2] sm:$0xff]
    %v22 = vld [vmem:[#allocation2 + $0x8] sm:$0xff]
    %23 = vst [vmem:[#allocation5] sm:$0xff] %v21
    %24 = vst [vmem:[#allocation5 + $0x8] sm:$0xff] %v22
    // Predicated region
    $region10: #{tpu_custom_call.1} parent=1 // pred_check
      _
    $region11: #{tpu_custom_call.1} parent=1 // pred_check_branch
      %26 = sbr.rel (0) target = $region13
    $region12: #{tpu_custom_call.1} parent=1 // pred_region
      %s28 = ssub.s32 256, 256
      %29 = vsyncadd [#allocation4], %s28
      %s31 = sshll.u32 [#allocation5], 4
      %s32 = int_to_ptr.vmem [resolvable:$true] %s31
      %34 = dma.vmem_to_hbm [thread:$0]  %s32, 256, %s1, [#allocation4]
    $region13: #{tpu_custom_call.1} parent=1 // pred_fallthru
      _
    // Predicated region
    $region14: #{tpu_custom_call.1} parent=1 // pred_check
      _
    $region15: #{tpu_custom_call.1} parent=1 // pred_check_branch
      %36 = sbr.rel (0) target = $region17
    $region16: #{tpu_custom_call.1} parent=1 // pred_region
      %37 = dma.done [#allocation4], 256
    $region17: #{tpu_custom_call.1} parent=1 // pred_fallthru
      _
    %38 = vsyncpa [#allocation3], 1
    %39 = vsyncpa [#allocation4], 1

</llo_original>
